<compile_context>
chip_gen: v7x
topology: tpu7x:2x2x1
jax: 0.10.0
libtpu: 0.0.40
codegen_flags: <defaults>
</compile_context>

<pallas_src>
import math
import functools

import jax
import jax.numpy as jnp
from jax.experimental import pallas as pl
from jax.experimental.pallas import tpu as pltpu


# ------------------------------ Pallas kernel ---------------------------------
def transformer_block_kernel(
    x_ref, n1_ref, n2_ref,
    wqkv_ref, bqkv_ref, wo_ref, bo_ref,
    wp_ref, bp_ref, w2_ref, b2_ref,
    rope_a_ref, rope_b_ref, bias_ref,
    o_ref,
    *, num_heads, num_kv_heads, head_dim, eps):
    bf16 = jnp.bfloat16
    x = x_ref[...]                                   # (M, C) f32, M = B*T
    M, C = x.shape
    hd = head_dim
    rep = num_heads // num_kv_heads
    kvC = hd * num_kv_heads

    rope_a = rope_a_ref[...]                         # (M, hd) = [cos | -cos]
    rope_b = rope_b_ref[...]                         # (M, hd) = [-sin | sin]
    bias = bias_ref[...]                             # (rep*M, M) additive mask

    def rmsnorm(v, g):
        # The module's "RMSNorm" is L2-norm normalisation: v / (||v|| + eps) * g.
        norm = jnp.sqrt(jnp.sum(v * v, axis=-1, keepdims=True))
        return v * pl.reciprocal(norm + eps, approx=True) * g

    def rope(v):
        # Per-head column layout is [evens | odds] (folded into the weight perm).
        # rotated = v*A + swap_halves(v)*B.
        # TODO(synk): at real head_dim (==128) use pltpu.roll(v, hd//2, axis=-1)
        #             so the swap rides the XLU slot instead of slice+concat.
        swapped = jnp.concatenate([v[:, hd // 2:], v[:, :hd // 2]], axis=-1)
        return v * rope_a + swapped * rope_b

    # ---------------- attention sub-block ----------------
    h = rmsnorm(x, n1_ref[...])                      # (M, C)
    # fused, pre-transposed, bf16 QKV projection: (M, C) @ (C, C + 2*kvC)
    qkv = jnp.dot(h.astype(bf16), wqkv_ref[...],
                  preferred_element_type=jnp.float32) + bqkv_ref[...]

    ctx_parts = []
    for g in range(num_kv_heads):
        k_g = rope(qkv[:, C + g * hd:C + (g + 1) * hd]).astype(bf16)        # (M, hd)
        v_g = qkv[:, C + kvC + g * hd:C + kvC + (g + 1) * hd].astype(bf16)  # (M, hd)

        # Stack the `rep` query heads that share this kv head along rows:
        # one (rep*M, hd) operand -> one big score matmul, no K/V repeat.
        q_heads = []
        for r in range(rep):
            h_idx = g * rep + r
            q_heads.append(rope(qkv[:, h_idx * hd:(h_idx + 1) * hd]))       # (M, hd)
        q_stack = jnp.concatenate(q_heads, axis=0).astype(bf16)             # (rep*M, hd)

        # scores (1/sqrt(hd) already folded into wq/bq)
        s = jnp.einsum('md,sd->ms', q_stack, k_g,
                       preferred_element_type=jnp.float32)                  # (rep*M, M)
        s = s + bias                                  # causal + block-diag batch mask
        s = s - jnp.max(s, axis=-1, keepdims=True)
        p = jnp.exp(s)
        p = p * pl.reciprocal(jnp.sum(p, axis=-1, keepdims=True), approx=True)

        c = jnp.dot(p.astype(bf16), v_g,
                    preferred_element_type=jnp.float32)                     # (rep*M, hd)
        for r in range(rep):
            ctx_parts.append(c[r * M:(r + 1) * M, :])                       # head g*rep + r
    ctx = jnp.concatenate(ctx_parts, axis=-1)                               # (M, C), head-major

    # 1/block_scale already folded into wo/bo in the wrapper.
    attn_out = jnp.dot(ctx.astype(bf16), wo_ref[...],
                       preferred_element_type=jnp.float32) + bo_ref[...]
    x1 = x + attn_out

    # ---------------- feed-forward sub-block ----------------
    h2 = rmsnorm(x1, n2_ref[...])
    pg = jnp.dot(h2.astype(bf16), wp_ref[...],
                 preferred_element_type=jnp.float32) + bp_ref[...]
    xp = pg[:, :C]
    gate = pg[:, C:]
    swiglu = xp * (gate * jax.nn.sigmoid(gate))
    ffn = jnp.dot(swiglu.astype(bf16), w2_ref[...],
                  preferred_element_type=jnp.float32) + b2_ref[...]
    o_ref[...] = (x1 + ffn).astype(o_ref.dtype)


# ------------------------------ wrapper ---------------------------------------
def _deinterleave_perm(n_heads, hd):
    """new column -> old column: per head, evens first then odds."""
    half = hd // 2
    idx = []
    for h in range(n_heads):
        base = h * hd
        idx.extend(base + 2 * j for j in range(half))
        idx.extend(base + 2 * j + 1 for j in range(half))
    return jnp.asarray(idx, dtype=jnp.int32)


def transformer_block(x, params, *, num_heads, num_kv_heads, num_layers=1, eps=1e-8):
    B, T, C = x.shape
    hd = C // num_heads
    kvC = hd * num_kv_heads
    rep = num_heads // num_kv_heads
    M = B * T
    block_scale = float((2 * num_layers) ** 0.5)
    inv_sqrt_hd = 1.0 / math.sqrt(hd)
    bf16 = jnp.bfloat16

    # --- rotary tables, half-split per-head layout: A=[cos|-cos], B=[-sin|sin] ---
    inv_freq = 1.0 / (10000.0 ** (jnp.arange(0, hd, 2, dtype=jnp.float32) / hd))
    pos = jnp.arange(T, dtype=jnp.float32)
    freqs = pos[:, None] * inv_freq[None, :]                          # (T, hd//2)
    cos, sin = jnp.cos(freqs), jnp.sin(freqs)
    rope_a = jnp.tile(jnp.concatenate([cos, -cos], axis=-1), (B, 1))  # (M, hd)
    rope_b = jnp.tile(jnp.concatenate([-sin, sin], axis=-1), (B, 1))  # (M, hd)

    # --- additive mask over the folded (B*T) token axis: causal within a batch,
    #     fully masked across batches; tiled over the `rep` stacked q heads ---
    tok = jnp.arange(M, dtype=jnp.int32)
    same_b = (tok[:, None] // T) == (tok[None, :] // T)
    causal = (tok[None, :] % T) <= (tok[:, None] % T)
    bias = jnp.where(same_b & causal, 0.0, -1e30).astype(jnp.float32)  # (M, M)
    bias = jnp.tile(bias, (rep, 1))                                    # (rep*M, M)

    # --- fold rotary de-interleave into Q/K weight rows, 1/sqrt(hd) into Q,
    #     1/block_scale into wo/bo and w2/b2; fuse QKV; pre-transpose; cast bf16 ---
    perm_q = _deinterleave_perm(num_heads, hd)
    perm_k = _deinterleave_perm(num_kv_heads, hd)
    wq_p = params["wq"][perm_q] * inv_sqrt_hd
    bq_p = params["bq"][:, perm_q] * inv_sqrt_hd
    wk_p = params["wk"][perm_k]
    bk_p = params["bk"][:, perm_k]

    w_qkv_t = jnp.concatenate([wq_p, wk_p, params["wv"]], axis=0).T.astype(bf16)  # (C, C+2*kvC)
    b_qkv = jnp.concatenate([bq_p, bk_p, params["bv"]], axis=1)                   # (1, C+2*kvC)
    wo_t = (params["wo"].T / block_scale).astype(bf16)                            # (C, C)
    bo_s = params["bo"] / block_scale
    wp_t = params["wp"].T.astype(bf16)                                            # (C, 2C)
    w2_t = (params["w2"].T / block_scale).astype(bf16)                            # (C, C)
    b2_s = params["b2"] / block_scale

    x2d = x.reshape(M, C)   # fold batch into the matmul M dimension (single invocation)

    kernel = functools.partial(
        transformer_block_kernel,
        num_heads=num_heads, num_kv_heads=num_kv_heads, head_dim=hd, eps=eps)

    out = pl.pallas_call(
        kernel,
        out_shape=jax.ShapeDtypeStruct((M, C), x.dtype),
        # TODO(synk): re-derive per generation when scaling up (~48-56 MiB on v7x,
        #             ~100+ MiB on v5e/v6e); tiny footprint here.
        compiler_params=pltpu.CompilerParams(vmem_limit_bytes=32 * 1024 * 1024),
    )(x2d, params["n1"], params["n2"],
      w_qkv_t, b_qkv, wo_t, bo_s,
      wp_t, params["bp"], w2_t, b2_s,
      rope_a, rope_b, bias)
    return out.reshape(B, T, C)


# ------------------------------ reference -------------------------------------
def reference(x, params, *, num_heads, num_kv_heads, num_layers=1, eps=1e-8):
    B, T, C = x.shape
    hd = C // num_heads
    scale = (2 * num_layers) ** 0.5

    def rms(v, g):
        n = jnp.sqrt(jnp.sum(v * v, axis=-1, keepdims=True))
        return v / (n + eps) * g

    def rot(v, cos, sin):  # v: (B,H,T,hd)
        x1, x2 = v[..., 0::2], v[..., 1::2]
        return jnp.concatenate([x1 * cos - x2 * sin, x1 * sin - x2 * cos], axis=-1)

    h = rms(x, params["n1"])
    q = h @ params["wq"].T + params["bq"]
    k = h @ params["wk"].T + params["bk"]
    v = h @ params["wv"].T + params["bv"]
    q = q.reshape(B, T, num_heads, hd).transpose(0, 2, 1, 3)
    k = k.reshape(B, T, num_kv_heads, hd).transpose(0, 2, 1, 3)
    v = v.reshape(B, T, num_kv_heads, hd).transpose(0, 2, 1, 3)

    inv_freq = 1.0 / (10000.0 ** (jnp.arange(0, hd, 2, dtype=jnp.float32) / hd))
    freqs = jnp.arange(T, dtype=jnp.float32)[:, None] * inv_freq[None, :]
    cos, sin = jnp.cos(freqs)[None, None], jnp.sin(freqs)[None, None]
    q, k = rot(q, cos, sin), rot(k, cos, sin)

    rep = num_heads // num_kv_heads
    k = jnp.repeat(k, rep, axis=1)
    v = jnp.repeat(v, rep, axis=1)

    scores = q @ k.transpose(0, 1, 3, 2) / math.sqrt(hd)
    mask = jnp.tril(jnp.ones((T, T)))[None, None]
    scores = jnp.where(mask == 0, -jnp.inf, scores)
    attn = jax.nn.softmax(scores, axis=-1)
    ctx = (attn @ v).transpose(0, 2, 1, 3).reshape(B, T, C)
    x1 = x + (ctx @ params["wo"].T + params["bo"]) / scale

    h2 = rms(x1, params["n2"])
    pg = h2 @ params["wp"].T + params["bp"]
    xp, g = pg[..., :C], pg[..., C:]
    ffn = (xp * (g * jax.nn.sigmoid(g))) @ params["w2"].T + params["b2"]
    return x1 + ffn / scale


# -------------------------------- main -----------------------------------------
if __name__ == "__main__":
    B, T, C = 2, 8, 32
    num_heads, num_kv_heads, num_layers = 4, 2, 1
    hd = C // num_heads
    kvC = hd * num_kv_heads

    key = jax.random.PRNGKey(0)
    ks = jax.random.split(key, 16)
    f32 = jnp.float32

    params = {
        "n1": jnp.ones((1, C), f32) + 0.1 * jax.random.normal(ks[1], (1, C), f32),
        "n2": jnp.ones((1, C), f32) + 0.1 * jax.random.normal(ks[2], (1, C), f32),
        "wq": 0.05 * jax.random.normal(ks[3], (C, C), f32),
        "bq": 0.01 * jax.random.normal(ks[4], (1, C), f32),
        "wk": 0.05 * jax.random.normal(ks[5], (kvC, C), f32),
        "bk": 0.01 * jax.random.normal(ks[6], (1, kvC), f32),
        "wv": 0.05 * jax.random.normal(ks[7], (kvC, C), f32),
        "bv": 0.01 * jax.random.normal(ks[8], (1, kvC), f32),
        "wo": 0.05 * jax.random.normal(ks[9], (C, C), f32),
        "bo": 0.01 * jax.random.normal(ks[10], (1, C), f32),
        "wp": 0.05 * jax.random.normal(ks[11], (2 * C, C), f32),
        "bp": 0.01 * jax.random.normal(ks[12], (1, 2 * C), f32),
        "w2": 0.05 * jax.random.normal(ks[13], (C, C), f32),
        "b2": 0.01 * jax.random.normal(ks[14], (1, C), f32),
    }
    x = jax.random.normal(ks[0], (B, T, C), f32)

    out = transformer_block(x, params, num_heads=num_heads,
                            num_kv_heads=num_kv_heads, num_layers=num_layers)
    out = jax.block_until_ready(out)

    ref = reference(x, params, num_heads=num_heads,
                    num_kv_heads=num_kv_heads, num_layers=num_layers)
    err = float(jnp.max(jnp.abs(out - ref)))
    # bf16 MXU operands + approx-reciprocals -> looser than the old 1e-4 f32 check.
    assert err < 5e-3, f"mismatch vs f32 reference: max abs err = {err}"
    print("KERNEL_OK")
</pallas_src>

<mosaic_0001>
module attributes {stable_mosaic.version = 11 : i64} {
  func.func @transformer_block_kernel(%arg0: memref<16x32xf32, #tpu.memory_space<vmem>>, %arg1: memref<1x32xf32, #tpu.memory_space<vmem>>, %arg2: memref<1x32xf32, #tpu.memory_space<vmem>>, %arg3: memref<32x64xbf16, #tpu.memory_space<vmem>>, %arg4: memref<1x64xf32, #tpu.memory_space<vmem>>, %arg5: memref<32x32xbf16, #tpu.memory_space<vmem>>, %arg6: memref<1x32xf32, #tpu.memory_space<vmem>>, %arg7: memref<32x64xbf16, #tpu.memory_space<vmem>>, %arg8: memref<1x64xf32, #tpu.memory_space<vmem>>, %arg9: memref<32x32xbf16, #tpu.memory_space<vmem>>, %arg10: memref<1x32xf32, #tpu.memory_space<vmem>>, %arg11: memref<16x8xf32, #tpu.memory_space<vmem>>, %arg12: memref<16x8xf32, #tpu.memory_space<vmem>>, %arg13: memref<32x16xf32, #tpu.memory_space<vmem>>, %arg14: memref<16x32xf32, #tpu.memory_space<vmem>>) attributes {dimension_semantics = [], scalar_prefetch = 0 : i64, scratch_operands = 0 : i64, tpu.core_type = #tpu.core_type<tc>} {
    %c0 = arith.constant 0 : index
    %c0_0 = arith.constant 0 : index
    %0 = vector.load %arg0[%c0, %c0_0] : memref<16x32xf32, #tpu.memory_space<vmem>>, vector<16x32xf32>
    %c0_1 = arith.constant 0 : index
    %c0_2 = arith.constant 0 : index
    %1 = vector.load %arg11[%c0_1, %c0_2] : memref<16x8xf32, #tpu.memory_space<vmem>>, vector<16x8xf32>
    %c0_3 = arith.constant 0 : index
    %c0_4 = arith.constant 0 : index
    %2 = vector.load %arg12[%c0_3, %c0_4] : memref<16x8xf32, #tpu.memory_space<vmem>>, vector<16x8xf32>
    %c0_5 = arith.constant 0 : index
    %c0_6 = arith.constant 0 : index
    %3 = vector.load %arg13[%c0_5, %c0_6] : memref<32x16xf32, #tpu.memory_space<vmem>>, vector<32x16xf32>
    %c0_7 = arith.constant 0 : index
    %c0_8 = arith.constant 0 : index
    %4 = vector.load %arg1[%c0_7, %c0_8] : memref<1x32xf32, #tpu.memory_space<vmem>>, vector<1x32xf32>
    %5 = arith.mulf %0, %0 : vector<16x32xf32>
    %cst = arith.constant dense<0.000000e+00> : vector<16xf32>
    %6 = vector.multi_reduction <add>, %5, %cst [1] : vector<16x32xf32> to vector<16xf32>
    %7 = vector.shape_cast %6 : vector<16xf32> to vector<16x1xf32>
    %8 = math.sqrt %7 : vector<16x1xf32>
    %cst_9 = arith.constant 9.99999993E-9 : f32
    %9 = vector.broadcast %cst_9 : f32 to vector<16x1xf32>
    %10 = arith.addf %8, %9 : vector<16x1xf32>
    %11 = tpu.reciprocal %10 {approx = true} : vector<16x1xf32> -> vector<16x1xf32>
    %12 = vector.broadcast %11 : vector<16x1xf32> to vector<16x32xf32>
    %13 = arith.mulf %0, %12 : vector<16x32xf32>
    %14 = vector.broadcast %4 : vector<1x32xf32> to vector<16x32xf32>
    %15 = arith.mulf %13, %14 : vector<16x32xf32>
    %16 = arith.truncf %15 : vector<16x32xf32> to vector<16x32xbf16>
    %c0_10 = arith.constant 0 : index
    %c0_11 = arith.constant 0 : index
    %17 = vector.load %arg3[%c0_10, %c0_11] : memref<32x64xbf16, #tpu.memory_space<vmem>>, vector<32x64xbf16>
    %cst_12 = arith.constant dense<0.000000e+00> : vector<16x64xf32>
    %18 = tpu.matmul %16, %17, %cst_12 {dimension_numbers = #tpu.dot_dimension_numbers<[1], [0], [0], [1], [0, 0, 1, 1], [], []>} : vector<16x32xbf16>, vector<32x64xbf16>, vector<16x64xf32> -> vector<16x64xf32>
    %c0_13 = arith.constant 0 : index
    %c0_14 = arith.constant 0 : index
    %19 = vector.load %arg4[%c0_13, %c0_14] : memref<1x64xf32, #tpu.memory_space<vmem>>, vector<1x64xf32>
    %20 = vector.broadcast %19 : vector<1x64xf32> to vector<16x64xf32>
    %21 = arith.addf %18, %20 : vector<16x64xf32>
    %22 = vector.extract_strided_slice %21 {offsets = [0, 32], sizes = [16, 8], strides = [1, 1]} : vector<16x64xf32> to vector<16x8xf32>
    %23 = vector.extract_strided_slice %22 {offsets = [0, 4], sizes = [16, 4], strides = [1, 1]} : vector<16x8xf32> to vector<16x4xf32>
    %24 = vector.extract_strided_slice %22 {offsets = [0, 0], sizes = [16, 4], strides = [1, 1]} : vector<16x8xf32> to vector<16x4xf32>
    %25 = tpu.concatenate %23, %24 in 1 : vector<16x4xf32>, vector<16x4xf32> -> vector<16x8xf32>
    %26 = arith.mulf %22, %1 : vector<16x8xf32>
    %27 = arith.mulf %25, %2 : vector<16x8xf32>
    %28 = arith.addf %26, %27 : vector<16x8xf32>
    %29 = arith.truncf %28 : vector<16x8xf32> to vector<16x8xbf16>
    %30 = vector.extract_strided_slice %21 {offsets = [0, 48], sizes = [16, 8], strides = [1, 1]} : vector<16x64xf32> to vector<16x8xf32>
    %31 = arith.truncf %30 : vector<16x8xf32> to vector<16x8xbf16>
    %32 = vector.extract_strided_slice %21 {offsets = [0, 0], sizes = [16, 8], strides = [1, 1]} : vector<16x64xf32> to vector<16x8xf32>
    %33 = vector.extract_strided_slice %32 {offsets = [0, 4], sizes = [16, 4], strides = [1, 1]} : vector<16x8xf32> to vector<16x4xf32>
    %34 = vector.extract_strided_slice %32 {offsets = [0, 0], sizes = [16, 4], strides = [1, 1]} : vector<16x8xf32> to vector<16x4xf32>
    %35 = tpu.concatenate %33, %34 in 1 : vector<16x4xf32>, vector<16x4xf32> -> vector<16x8xf32>
    %36 = arith.mulf %32, %1 : vector<16x8xf32>
    %37 = arith.mulf %35, %2 : vector<16x8xf32>
    %38 = arith.addf %36, %37 : vector<16x8xf32>
    %39 = vector.extract_strided_slice %21 {offsets = [0, 8], sizes = [16, 8], strides = [1, 1]} : vector<16x64xf32> to vector<16x8xf32>
    %40 = vector.extract_strided_slice %39 {offsets = [0, 4], sizes = [16, 4], strides = [1, 1]} : vector<16x8xf32> to vector<16x4xf32>
    %41 = vector.extract_strided_slice %39 {offsets = [0, 0], sizes = [16, 4], strides = [1, 1]} : vector<16x8xf32> to vector<16x4xf32>
    %42 = tpu.concatenate %40, %41 in 1 : vector<16x4xf32>, vector<16x4xf32> -> vector<16x8xf32>
    %43 = arith.mulf %39, %1 : vector<16x8xf32>
    %44 = arith.mulf %42, %2 : vector<16x8xf32>
    %45 = arith.addf %43, %44 : vector<16x8xf32>
    %46 = tpu.concatenate %38, %45 in 0 : vector<16x8xf32>, vector<16x8xf32> -> vector<32x8xf32>
    %47 = arith.truncf %46 : vector<32x8xf32> to vector<32x8xbf16>
    "tpu.trace_start"() <{level = 10 : i32, message = "md,sd->ms"}> : () -> ()
    %cst_15 = arith.constant dense<0.000000e+00> : vector<32x16xf32>
    %48 = tpu.matmul %47, %29, %cst_15 {dimension_numbers = #tpu.dot_dimension_numbers<[1], [1], [0], [0], [0, 0, 1, 0], [], []>} : vector<32x8xbf16>, vector<16x8xbf16>, vector<32x16xf32> -> vector<32x16xf32>
    "tpu.trace_stop"() : () -> ()
    %49 = arith.addf %48, %3 : vector<32x16xf32>
    %cst_16 = arith.constant dense<0xFF800000> : vector<32xf32>
    %50 = vector.multi_reduction <maximumf>, %49, %cst_16 [1] : vector<32x16xf32> to vector<32xf32>
    %51 = vector.shape_cast %50 : vector<32xf32> to vector<32x1xf32>
    %52 = vector.broadcast %51 : vector<32x1xf32> to vector<32x16xf32>
    %53 = arith.subf %49, %52 : vector<32x16xf32>
    %54 = math.exp %53 : vector<32x16xf32>
    %cst_17 = arith.constant dense<0.000000e+00> : vector<32xf32>
    %55 = vector.multi_reduction <add>, %54, %cst_17 [1] : vector<32x16xf32> to vector<32xf32>
    %56 = vector.shape_cast %55 : vector<32xf32> to vector<32x1xf32>
    %57 = tpu.reciprocal %56 {approx = true} : vector<32x1xf32> -> vector<32x1xf32>
    %58 = vector.broadcast %57 : vector<32x1xf32> to vector<32x16xf32>
    %59 = arith.mulf %54, %58 : vector<32x16xf32>
    %60 = arith.truncf %59 : vector<32x16xf32> to vector<32x16xbf16>
    %cst_18 = arith.constant dense<0.000000e+00> : vector<32x8xf32>
    %61 = tpu.matmul %60, %31, %cst_18 {dimension_numbers = #tpu.dot_dimension_numbers<[1], [0], [0], [1], [0, 0, 1, 1], [], []>} : vector<32x16xbf16>, vector<16x8xbf16>, vector<32x8xf32> -> vector<32x8xf32>
    %62 = vector.extract_strided_slice %61 {offsets = [0, 0], sizes = [16, 8], strides = [1, 1]} : vector<32x8xf32> to vector<16x8xf32>
    %63 = vector.extract_strided_slice %61 {offsets = [16, 0], sizes = [16, 8], strides = [1, 1]} : vector<32x8xf32> to vector<16x8xf32>
    %64 = vector.extract_strided_slice %21 {offsets = [0, 40], sizes = [16, 8], strides = [1, 1]} : vector<16x64xf32> to vector<16x8xf32>
    %65 = vector.extract_strided_slice %64 {offsets = [0, 4], sizes = [16, 4], strides = [1, 1]} : vector<16x8xf32> to vector<16x4xf32>
    %66 = vector.extract_strided_slice %64 {offsets = [0, 0], sizes = [16, 4], strides = [1, 1]} : vector<16x8xf32> to vector<16x4xf32>
    %67 = tpu.concatenate %65, %66 in 1 : vector<16x4xf32>, vector<16x4xf32> -> vector<16x8xf32>
    %68 = arith.mulf %64, %1 : vector<16x8xf32>
    %69 = arith.mulf %67, %2 : vector<16x8xf32>
    %70 = arith.addf %68, %69 : vector<16x8xf32>
    %71 = arith.truncf %70 : vector<16x8xf32> to vector<16x8xbf16>
    %72 = vector.extract_strided_slice %21 {offsets = [0, 56], sizes = [16, 8], strides = [1, 1]} : vector<16x64xf32> to vector<16x8xf32>
    %73 = arith.truncf %72 : vector<16x8xf32> to vector<16x8xbf16>
    %74 = vector.extract_strided_slice %21 {offsets = [0, 16], sizes = [16, 8], strides = [1, 1]} : vector<16x64xf32> to vector<16x8xf32>
    %75 = vector.extract_strided_slice %74 {offsets = [0, 4], sizes = [16, 4], strides = [1, 1]} : vector<16x8xf32> to vector<16x4xf32>
    %76 = vector.extract_strided_slice %74 {offsets = [0, 0], sizes = [16, 4], strides = [1, 1]} : vector<16x8xf32> to vector<16x4xf32>
    %77 = tpu.concatenate %75, %76 in 1 : vector<16x4xf32>, vector<16x4xf32> -> vector<16x8xf32>
    %78 = arith.mulf %74, %1 : vector<16x8xf32>
    %79 = arith.mulf %77, %2 : vector<16x8xf32>
    %80 = arith.addf %78, %79 : vector<16x8xf32>
    %81 = vector.extract_strided_slice %21 {offsets = [0, 24], sizes = [16, 8], strides = [1, 1]} : vector<16x64xf32> to vector<16x8xf32>
    %82 = vector.extract_strided_slice %81 {offsets = [0, 4], sizes = [16, 4], strides = [1, 1]} : vector<16x8xf32> to vector<16x4xf32>
    %83 = vector.extract_strided_slice %81 {offsets = [0, 0], sizes = [16, 4], strides = [1, 1]} : vector<16x8xf32> to vector<16x4xf32>
    %84 = tpu.concatenate %82, %83 in 1 : vector<16x4xf32>, vector<16x4xf32> -> vector<16x8xf32>
    %85 = arith.mulf %81, %1 : vector<16x8xf32>
    %86 = arith.mulf %84, %2 : vector<16x8xf32>
    %87 = arith.addf %85, %86 : vector<16x8xf32>
    %88 = tpu.concatenate %80, %87 in 0 : vector<16x8xf32>, vector<16x8xf32> -> vector<32x8xf32>
    %89 = arith.truncf %88 : vector<32x8xf32> to vector<32x8xbf16>
    "tpu.trace_start"() <{level = 10 : i32, message = "md,sd->ms"}> : () -> ()
    %cst_19 = arith.constant dense<0.000000e+00> : vector<32x16xf32>
    %90 = tpu.matmul %89, %71, %cst_19 {dimension_numbers = #tpu.dot_dimension_numbers<[1], [1], [0], [0], [0, 0, 1, 0], [], []>} : vector<32x8xbf16>, vector<16x8xbf16>, vector<32x16xf32> -> vector<32x16xf32>
    "tpu.trace_stop"() : () -> ()
    %91 = arith.addf %90, %3 : vector<32x16xf32>
    %cst_20 = arith.constant dense<0xFF800000> : vector<32xf32>
    %92 = vector.multi_reduction <maximumf>, %91, %cst_20 [1] : vector<32x16xf32> to vector<32xf32>
    %93 = vector.shape_cast %92 : vector<32xf32> to vector<32x1xf32>
    %94 = vector.broadcast %93 : vector<32x1xf32> to vector<32x16xf32>
    %95 = arith.subf %91, %94 : vector<32x16xf32>
    %96 = math.exp %95 : vector<32x16xf32>
    %cst_21 = arith.constant dense<0.000000e+00> : vector<32xf32>
    %97 = vector.multi_reduction <add>, %96, %cst_21 [1] : vector<32x16xf32> to vector<32xf32>
    %98 = vector.shape_cast %97 : vector<32xf32> to vector<32x1xf32>
    %99 = tpu.reciprocal %98 {approx = true} : vector<32x1xf32> -> vector<32x1xf32>
    %100 = vector.broadcast %99 : vector<32x1xf32> to vector<32x16xf32>
    %101 = arith.mulf %96, %100 : vector<32x16xf32>
    %102 = arith.truncf %101 : vector<32x16xf32> to vector<32x16xbf16>
    %cst_22 = arith.constant dense<0.000000e+00> : vector<32x8xf32>
    %103 = tpu.matmul %102, %73, %cst_22 {dimension_numbers = #tpu.dot_dimension_numbers<[1], [0], [0], [1], [0, 0, 1, 1], [], []>} : vector<32x16xbf16>, vector<16x8xbf16>, vector<32x8xf32> -> vector<32x8xf32>
    %104 = vector.extract_strided_slice %103 {offsets = [0, 0], sizes = [16, 8], strides = [1, 1]} : vector<32x8xf32> to vector<16x8xf32>
    %105 = vector.extract_strided_slice %103 {offsets = [16, 0], sizes = [16, 8], strides = [1, 1]} : vector<32x8xf32> to vector<16x8xf32>
    %106 = tpu.concatenate %62, %63, %104, %105 in 1 : vector<16x8xf32>, vector<16x8xf32>, vector<16x8xf32>, vector<16x8xf32> -> vector<16x32xf32>
    %107 = arith.truncf %106 : vector<16x32xf32> to vector<16x32xbf16>
    %c0_23 = arith.constant 0 : index
    %c0_24 = arith.constant 0 : index
    %108 = vector.load %arg5[%c0_23, %c0_24] : memref<32x32xbf16, #tpu.memory_space<vmem>>, vector<32x32xbf16>
    %cst_25 = arith.constant dense<0.000000e+00> : vector<16x32xf32>
    %109 = tpu.matmul %107, %108, %cst_25 {dimension_numbers = #tpu.dot_dimension_numbers<[1], [0], [0], [1], [0, 0, 1, 1], [], []>} : vector<16x32xbf16>, vector<32x32xbf16>, vector<16x32xf32> -> vector<16x32xf32>
    %c0_26 = arith.constant 0 : index
    %c0_27 = arith.constant 0 : index
    %110 = vector.load %arg6[%c0_26, %c0_27] : memref<1x32xf32, #tpu.memory_space<vmem>>, vector<1x32xf32>
    %111 = vector.broadcast %110 : vector<1x32xf32> to vector<16x32xf32>
    %112 = arith.addf %109, %111 : vector<16x32xf32>
    %113 = arith.addf %0, %112 : vector<16x32xf32>
    %c0_28 = arith.constant 0 : index
    %c0_29 = arith.constant 0 : index
    %114 = vector.load %arg2[%c0_28, %c0_29] : memref<1x32xf32, #tpu.memory_space<vmem>>, vector<1x32xf32>
    %115 = arith.mulf %113, %113 : vector<16x32xf32>
    %cst_30 = arith.constant dense<0.000000e+00> : vector<16xf32>
    %116 = vector.multi_reduction <add>, %115, %cst_30 [1] : vector<16x32xf32> to vector<16xf32>
    %117 = vector.shape_cast %116 : vector<16xf32> to vector<16x1xf32>
    %118 = math.sqrt %117 : vector<16x1xf32>
    %cst_31 = arith.constant 9.99999993E-9 : f32
    %119 = vector.broadcast %cst_31 : f32 to vector<16x1xf32>
    %120 = arith.addf %118, %119 : vector<16x1xf32>
    %121 = tpu.reciprocal %120 {approx = true} : vector<16x1xf32> -> vector<16x1xf32>
    %122 = vector.broadcast %121 : vector<16x1xf32> to vector<16x32xf32>
    %123 = arith.mulf %113, %122 : vector<16x32xf32>
    %124 = vector.broadcast %114 : vector<1x32xf32> to vector<16x32xf32>
    %125 = arith.mulf %123, %124 : vector<16x32xf32>
    %126 = arith.truncf %125 : vector<16x32xf32> to vector<16x32xbf16>
    %c0_32 = arith.constant 0 : index
    %c0_33 = arith.constant 0 : index
    %127 = vector.load %arg7[%c0_32, %c0_33] : memref<32x64xbf16, #tpu.memory_space<vmem>>, vector<32x64xbf16>
    %cst_34 = arith.constant dense<0.000000e+00> : vector<16x64xf32>
    %128 = tpu.matmul %126, %127, %cst_34 {dimension_numbers = #tpu.dot_dimension_numbers<[1], [0], [0], [1], [0, 0, 1, 1], [], []>} : vector<16x32xbf16>, vector<32x64xbf16>, vector<16x64xf32> -> vector<16x64xf32>
    %c0_35 = arith.constant 0 : index
    %c0_36 = arith.constant 0 : index
    %129 = vector.load %arg8[%c0_35, %c0_36] : memref<1x64xf32, #tpu.memory_space<vmem>>, vector<1x64xf32>
    %130 = vector.broadcast %129 : vector<1x64xf32> to vector<16x64xf32>
    %131 = arith.addf %128, %130 : vector<16x64xf32>
    %132 = vector.extract_strided_slice %131 {offsets = [0, 0], sizes = [16, 32], strides = [1, 1]} : vector<16x64xf32> to vector<16x32xf32>
    %133 = vector.extract_strided_slice %131 {offsets = [0, 32], sizes = [16, 32], strides = [1, 1]} : vector<16x64xf32> to vector<16x32xf32>
    %134 = arith.negf %133 : vector<16x32xf32>
    %135 = math.exp %134 : vector<16x32xf32>
    %cst_37 = arith.constant 1.000000e+00 : f32
    %136 = vector.broadcast %cst_37 : f32 to vector<16x32xf32>
    %137 = arith.addf %136, %135 : vector<16x32xf32>
    %138 = arith.divf %136, %137 : vector<16x32xf32>
    %139 = arith.mulf %133, %138 : vector<16x32xf32>
    %140 = arith.mulf %132, %139 : vector<16x32xf32>
    %141 = arith.truncf %140 : vector<16x32xf32> to vector<16x32xbf16>
    %c0_38 = arith.constant 0 : index
    %c0_39 = arith.constant 0 : index
    %142 = vector.load %arg9[%c0_38, %c0_39] : memref<32x32xbf16, #tpu.memory_space<vmem>>, vector<32x32xbf16>
    %cst_40 = arith.constant dense<0.000000e+00> : vector<16x32xf32>
    %143 = tpu.matmul %141, %142, %cst_40 {dimension_numbers = #tpu.dot_dimension_numbers<[1], [0], [0], [1], [0, 0, 1, 1], [], []>} : vector<16x32xbf16>, vector<32x32xbf16>, vector<16x32xf32> -> vector<16x32xf32>
    %c0_41 = arith.constant 0 : index
    %c0_42 = arith.constant 0 : index
    %144 = vector.load %arg10[%c0_41, %c0_42] : memref<1x32xf32, #tpu.memory_space<vmem>>, vector<1x32xf32>
    %145 = vector.broadcast %144 : vector<1x32xf32> to vector<16x32xf32>
    %146 = arith.addf %143, %145 : vector<16x32xf32>
    %147 = arith.addf %113, %146 : vector<16x32xf32>
    %c0_43 = arith.constant 0 : index
    %c0_44 = arith.constant 0 : index
    %148 = vector.load %arg14[%c0_43, %c0_44] : memref<16x32xf32, #tpu.memory_space<vmem>>, vector<16x32xf32>
    tpu.vector_store %arg14[%c0_43, %c0_44], %147 {strides = array<i32>} : memref<16x32xf32, #tpu.memory_space<vmem>>, vector<16x32xf32>,
    return
  }
}

</mosaic_0001>

<llo_original>
// kernel: tpu_custom_call.1
$region0: #{tpu_custom_call.1}
  #allocation0 [shape = 'u32[]', space=smem, size = 0x4, offset = 0x4, fixed_abs, tag = 'smem constant byte address 0x4 - core index']
  #allocation1 [shape = 'u32[144,128]{1,0:T(1,128)}', space=vmem, size = 0x12000, scoped, tag = 'internal scratch']
  %s0 = inlined_call_operand.vmem [shape: f32[16,32], index: 0, kind: input, shape index: {}]
  %s1 = inlined_call_operand.vmem [shape: f32[1,32], index: 1, kind: input, shape index: {}]
  %s2 = inlined_call_operand.vmem [shape: f32[1,32], index: 2, kind: input, shape index: {}]
  %s3 = inlined_call_operand.vmem [shape: bf16[32,64], index: 3, kind: input, shape index: {}]
  %s4 = inlined_call_operand.hbm [shape: f32[1,64], index: 4, kind: input, shape index: {}]
  %s5 = inlined_call_operand.vmem [shape: bf16[32,32], index: 5, kind: input, shape index: {}]
  %s6 = inlined_call_operand.vmem [shape: f32[1,32], index: 6, kind: input, shape index: {}]
  %s7 = inlined_call_operand.vmem [shape: bf16[32,64], index: 7, kind: input, shape index: {}]
  %s8 = inlined_call_operand.vmem [shape: f32[1,64], index: 8, kind: input, shape index: {}]
  %s9 = inlined_call_operand.vmem [shape: bf16[32,32], index: 9, kind: input, shape index: {}]
  %s10 = inlined_call_operand.vmem [shape: f32[1,32], index: 10, kind: input, shape index: {}]
  %s11 = inlined_call_operand.vmem [shape: f32[16,8], index: 11, kind: input, shape index: {}]
  %s12 = inlined_call_operand.vmem [shape: f32[16,8], index: 12, kind: input, shape index: {}]
  %s13 = inlined_call_operand.vmem [shape: f32[32,16], index: 13, kind: input, shape index: {}]
  %s14 = inlined_call_operand.hbm [shape: f32[16,32], index: 14, kind: output, shape index: {}]
  %s15 = sld [smem:[#allocation0]]
  $region70: #{tpu_custom_call.1} parent=0
    _
  %s17 = ssub.s32 1, %s15
  %s18 = scalar_select 0, %s17, %s15
  $region1: #{tpu_custom_call.1} parent=0
    #allocation2 [shape = 'u8[512]{0}', space=vmem, size = 0x400, scoped, tag = 'input window, operand 4, single buffered']
    #allocation3 [shape = 's32[1]{0}', space=sflag, size = 0x4, scoped, tag = 'scoped memory for tpu_custom_call.1']
    #allocation4 [shape = 's32[1]{0}', space=sflag, size = 0x4, scoped, tag = 'scoped memory for tpu_custom_call.1']
    #allocation5 [shape = 'u8[8192]{0}', space=vmem, size = 0x2000, scoped, tag = 'output window, operand 0, single buffered']
    %19 = vsyncpa [#allocation3], 0
    %20 = vsyncpa [#allocation4], 0
    // Predicated region
    $region2: #{tpu_custom_call.1} parent=1 // pred_check
      _
    $region3: #{tpu_custom_call.1} parent=1 // pred_check_branch
      %22 = sbr.rel (0) target = $region5
    $region4: #{tpu_custom_call.1} parent=1 // pred_region
      _
    $region5: #{tpu_custom_call.1} parent=1 // pred_fallthru
      _
    // Predicated region
    $region6: #{tpu_custom_call.1} parent=1 // pred_check
      _
    $region7: #{tpu_custom_call.1} parent=1 // pred_check_branch
      %24 = sbr.rel (0) target = $region9
    $region8: #{tpu_custom_call.1} parent=1 // pred_region
      _
    $region9: #{tpu_custom_call.1} parent=1 // pred_fallthru
      _
    // Predicated region
    $region10: #{tpu_custom_call.1} parent=1 // pred_check
      _
    $region11: #{tpu_custom_call.1} parent=1 // pred_check_branch
      %26 = sbr.rel (0) target = $region13
    $region12: #{tpu_custom_call.1} parent=1 // pred_region
      _
    $region13: #{tpu_custom_call.1} parent=1 // pred_fallthru
      _
    // Predicated region
    $region14: #{tpu_custom_call.1} parent=1 // pred_check
      _
    $region15: #{tpu_custom_call.1} parent=1 // pred_check_branch
      %28 = sbr.rel (0) target = $region17
    $region16: #{tpu_custom_call.1} parent=1 // pred_region
      _
    $region17: #{tpu_custom_call.1} parent=1 // pred_fallthru
      _
    // Predicated region
    $region18: #{tpu_custom_call.1} parent=1 // pred_check
      _
    $region19: #{tpu_custom_call.1} parent=1 // pred_check_branch
      %30 = sbr.rel (0) target = $region21
    $region20: #{tpu_custom_call.1} parent=1 // pred_region
      %s32 = ssub.s32 16, 16
      %33 = vsyncadd [#allocation3], %s32
      %s35 = sshll.u32 [#allocation2], 4
      %s36 = int_to_ptr.vmem [resolvable:$true] %s35
      %38 = dma.hbm_to_vmem [thread:$0]  %s4, 16, %s36, [#allocation3]
    $region21: #{tpu_custom_call.1} parent=1 // pred_fallthru
      _
    // Predicated region
    $region22: #{tpu_custom_call.1} parent=1 // pred_check
      _
    $region23: #{tpu_custom_call.1} parent=1 // pred_check_branch
      %40 = sbr.rel (0) target = $region25
    $region24: #{tpu_custom_call.1} parent=1 // pred_region
      _
    $region25: #{tpu_custom_call.1} parent=1 // pred_fallthru
      _
    // Predicated region
    $region26: #{tpu_custom_call.1} parent=1 // pred_check
      _
    $region27: #{tpu_custom_call.1} parent=1 // pred_check_branch
      %42 = sbr.rel (0) target = $region29
    $region28: #{tpu_custom_call.1} parent=1 // pred_region
      _
    $region29: #{tpu_custom_call.1} parent=1 // pred_fallthru
      _
    // Predicated region
    $region30: #{tpu_custom_call.1} parent=1 // pred_check
      _
    $region31: #{tpu_custom_call.1} parent=1 // pred_check_branch
      %44 = sbr.rel (0) target = $region33
    $region32: #{tpu_custom_call.1} parent=1 // pred_region
      _
    $region33: #{tpu_custom_call.1} parent=1 // pred_fallthru
      _
    // Predicated region
    $region34: #{tpu_custom_call.1} parent=1 // pred_check
      _
    $region35: #{tpu_custom_call.1} parent=1 // pred_check_branch
      %46 = sbr.rel (0) target = $region37
    $region36: #{tpu_custom_call.1} parent=1 // pred_region
      _
    $region37: #{tpu_custom_call.1} parent=1 // pred_fallthru
      _
    // Predicated region
    $region38: #{tpu_custom_call.1} parent=1 // pred_check
      _
    $region39: #{tpu_custom_call.1} parent=1 // pred_check_branch
      %48 = sbr.rel (0) target = $region41
    $region40: #{tpu_custom_call.1} parent=1 // pred_region
      _
    $region41: #{tpu_custom_call.1} parent=1 // pred_fallthru
      _
    // Predicated region
    $region42: #{tpu_custom_call.1} parent=1 // pred_check
      _
    $region43: #{tpu_custom_call.1} parent=1 // pred_check_branch
      %50 = sbr.rel (0) target = $region45
    $region44: #{tpu_custom_call.1} parent=1 // pred_region
      _
    $region45: #{tpu_custom_call.1} parent=1 // pred_fallthru
      _
    // Predicated region
    $region46: #{tpu_custom_call.1} parent=1 // pred_check
      _
    $region47: #{tpu_custom_call.1} parent=1 // pred_check_branch
      %52 = sbr.rel (0) target = $region49
    $region48: #{tpu_custom_call.1} parent=1 // pred_region
      _
    $region49: #{tpu_custom_call.1} parent=1 // pred_fallthru
      _
    // Predicated region
    $region50: #{tpu_custom_call.1} parent=1 // pred_check
      _
    $region51: #{tpu_custom_call.1} parent=1 // pred_check_branch
      %54 = sbr.rel (0) target = $region53
    $region52: #{tpu_custom_call.1} parent=1 // pred_region
      _
    $region53: #{tpu_custom_call.1} parent=1 // pred_fallthru
      _
    // Predicated region
    $region54: #{tpu_custom_call.1} parent=1 // pred_check
      _
    $region55: #{tpu_custom_call.1} parent=1 // pred_check_branch
      %56 = sbr.rel (0) target = $region57
    $region56: #{tpu_custom_call.1} parent=1 // pred_region
      _
    $region57: #{tpu_custom_call.1} parent=1 // pred_fallthru
      _
    // Predicated region
    $region58: #{tpu_custom_call.1} parent=1 // pred_check
      _
    $region59: #{tpu_custom_call.1} parent=1 // pred_check_branch
      %58 = sbr.rel (0) target = $region61
    $region60: #{tpu_custom_call.1} parent=1 // pred_region
      %59 = dma.done [#allocation3], 16
    $region61: #{tpu_custom_call.1} parent=1 // pred_fallthru
      _
    %v61 = vld [vmem:[%s0] sm:$0xff]
    %v62 = vld [vmem:[%s0 + $0x8] sm:$0xff]
    %v63 = vld [vmem:[%s11] sm:$0xff]
    %v64 = vld [vmem:[%s11 + $0x8] sm:$0xff]
    %v65 = vld [vmem:[%s12] sm:$0xff]
    %v66 = vld [vmem:[%s12 + $0x8] sm:$0xff]
    %v67 = vld [vmem:[%s13] sm:$0xff]
    %v68 = vld [vmem:[%s13 + $0x8] sm:$0xff]
    %v69 = vld [vmem:[%s13 + $0x10] sm:$0xff]
    %v70 = vld [vmem:[%s13 + $0x18] sm:$0xff]
    %v71 = vld [vmem:[%s1] sm:$0x1]
    %v72 = vmul.f32 %v61, %v61
    %v73 = vmul.f32 %v62, %v62
    %vm74 = vcmask 261120
    %v75 = vsel %vm74, %v72, 0.0
    %76 = vadd.xlane.f32.xlu0 %v75
    %v77 = vpop.xlane.xlu0 %76
    %v78 = vsel %vm74, %v73, 0.0
    %79 = vadd.xlane.f32.xlu0 %v78
    %v80 = vpop.xlane.xlu0 %79
    %v81 = vrsqrt.pop %v77
    %v82 = vmul.f32 %v77, %v81
    %vm83 = vcmp.eq.f32.partialorder %v77, inf
    %v84 = vsel %vm83, %v77, %v82
    %vm85 = vcmp.eq.f32.partialorder %v77, 0.0
    %v86 = vand.u32 %v77, 2147483648
    %v87 = vsel %vm85, %v86, %v84
    %v88 = vrsqrt.pop %v80
    %v89 = vmul.f32 %v80, %v88
    %vm90 = vcmp.eq.f32.partialorder %v80, inf
    %v91 = vsel %vm90, %v80, %v89
    %vm92 = vcmp.eq.f32.partialorder %v80, 0.0
    %v93 = vand.u32 %v80, 2147483648
    %v94 = vsel %vm92, %v93, %v91
    %v95 = vadd.f32 %v87, 1e-08
    %v96 = vadd.f32 %v94, 1e-08
    %v97 = vrcp.pop %v95
    %v98 = vrcp.pop %v96
    %v99 = vmul.f32 %v61, %v97
    %v100 = vmul.f32 %v62, %v98
    %v102 = vlaneseq
    %v103 = vshrl.u32 %v102, 7
    %v104 = vsub.s32 0, %v103
    %v105 = vrot.slane %v71, %v104
    %v107 = vmul.f32 %v99, %v105
    %v108 = vmul.f32 %v100, %v105
    %v109 = vpack.c.bf16 %v108, %v107
    %v110 = vld [vmem:[%s3] sm:$0xf]
    %v111 = vld [vmem:[%s3 + $0x4] sm:$0xf]
    %v112 = vld [vmem:[%s3 + $0x8] sm:$0xf]
    %v113 = vld [vmem:[%s3 + $0xc] sm:$0xf]
    %v114 = vld [vmem:[#allocation2] sm:$0x1]
    %v116 = vlaneseq
    %v117 = vshrl.u32 %v116, 7
    %v118 = vsub.s32 0, %v117
    %v119 = vrot.slane %v114, %v118
    %v125 = vunpack.c.l.b16 %v110
    %v126 = vunpack.c.l.b16 %v111
    %v127 = vunpack.c.l.b16 %v112
    %v128 = vunpack.c.l.b16 %v113
    %v129 = vpack.c.b16 %v126, %v125
    %v130 = vpack.c.b16 %v128, %v127
    %v134 = vsel %vm74, %v109, 0
    %136 = vmatprep.subr.bf16.mxu0 0
    %137 = vmatpush1.bf16.msra.mxu0 %v129
    %138 = vmatprep.subr.bf16.mxu0 0
    %139 = vmatpush1.bf16.msra.mxu0 %v130
    %140 = vmatprep.subr.bf16.mxu0 0
    %141 = vmatpush1.bf16.msra.mxu0 0
    %142 = vmatprep.subr.bf16.mxu0 0
    %143 = vmatpush1.bf16.msra.mxu0 0
    %144 = vmatprep.subr.bf16.mxu0 0
    %145 = vmatpush1.bf16.msra.mxu0 0
    %146 = vmatprep.subr.bf16.mxu0 0
    %147 = vmatpush1.bf16.msra.mxu0 0
    %148 = vmatprep.subr.bf16.mxu0 0
    %149 = vmatpush1.bf16.msra.mxu0 0
    %150 = vmatprep.subr.bf16.mxu0 0
    %151 = vmatpush1.bf16.msra.mxu0 0
    %152 = vmatprep.subr.bf16.mxu0 0
    %153 = vmatpush1.bf16.msra.mxu0 0
    %154 = vmatprep.subr.bf16.mxu0 0
    %155 = vmatpush1.bf16.msra.mxu0 0
    %156 = vmatprep.subr.bf16.mxu0 0
    %157 = vmatpush1.bf16.msra.mxu0 0
    %158 = vmatprep.subr.bf16.mxu0 0
    %159 = vmatpush1.bf16.msra.mxu0 0
    %160 = vmatprep.subr.bf16.mxu0 0
    %161 = vmatpush1.bf16.msra.mxu0 0
    %162 = vmatprep.subr.bf16.mxu0 0
    %163 = vmatpush1.bf16.msra.mxu0 0
    %164 = vmatprep.subr.bf16.mxu0 0
    %165 = vmatpush1.bf16.msra.mxu0 0
    %166 = vmatprep.subr.bf16.mxu0 0
    %167 = vmatpush1.bf16.msra.mxu0 0
    %168 = vmatprep.mubr.bf16.mxu0 0
    %169 = vmatmul.mubr.bf16.gmra.mrb[0].mxu0 %v134
    %v170 = vpop.f32.mrb[0].mxu0
    %v171 = vadd.f32 %v119, %v170
    %v172 = vpop.f32.mrb[0].mxu0
    %v173 = vpop.f32.mrb[0].mxu0
    %v174 = vadd.f32 %v119, %v173
    %v175 = vpop.f32.mrb[0].mxu0
    %176 = vdwg.mxu0
    %179 = vrot.lane.b32.xlu0 %v171, 92
    %v180 = vpop.permute.xlu0 %179
    %181 = vrot.lane.b32.xlu0 %v174, 92
    %v182 = vpop.permute.xlu0 %181
    %185 = vrot.lane.b32.xlu0 %v171, 100
    %v186 = vpop.permute.xlu0 %185
    %187 = vrot.lane.b32.xlu0 %v174, 100
    %v188 = vpop.permute.xlu0 %187
    %vm191 = vcmask 31744
    %v192 = vsel %vm191, %v180, %v186
    %v193 = vsel %vm191, %v182, %v188
    %196 = vrot.lane.b32.xlu0 %v63, 32
    %v197 = vpop.permute.xlu0 %196
    %198 = vrot.lane.b32.xlu0 %v64, 32
    %v199 = vpop.permute.xlu0 %198
    %v202 = vmul.f32 %v171, %v197
    %v203 = vmul.f32 %v174, %v199
    %v204 = vmul.f32 %v192, %v65
    %v205 = vmul.f32 %v193, %v66
    %208 = vrot.lane.b32.xlu0 %v204, 32
    %v209 = vpop.permute.xlu0 %208
    %210 = vrot.lane.b32.xlu0 %v205, 32
    %v211 = vpop.permute.xlu0 %210
    %v214 = vadd.f32 %v202, %v209
    %v215 = vadd.f32 %v203, %v211
    %v216 = vpack.c.bf16 %v215, %v214
    %v217 = vpack.c.bf16 %v174, %v171
    %218 = vrot.lane.b32.xlu0 %v171, 124
    %v219 = vpop.permute.xlu0 %218
    %220 = vrot.lane.b32.xlu0 %v174, 124
    %v221 = vpop.permute.xlu0 %220
    %224 = vrot.lane.b32.xlu0 %v171, 4
    %v225 = vpop.permute.xlu0 %224
    %226 = vrot.lane.b32.xlu0 %v174, 4
    %v227 = vpop.permute.xlu0 %226
    %v230 = vsel %vm191, %v219, %v225
    %v231 = vsel %vm191, %v221, %v227
    %v232 = vmul.f32 %v171, %v63
    %v233 = vmul.f32 %v174, %v64
    %v234 = vmul.f32 %v230, %v65
    %v235 = vmul.f32 %v231, %v66
    %v236 = vadd.f32 %v232, %v234
    %v237 = vadd.f32 %v233, %v235
    %238 = vrot.lane.b32.xlu0 %v171, 116
    %v239 = vpop.permute.xlu0 %238
    %240 = vrot.lane.b32.xlu0 %v174, 116
    %v241 = vpop.permute.xlu0 %240
    %v244 = vsel %vm191, %v239, %v219
    %v245 = vsel %vm191, %v241, %v221
    %246 = vrot.lane.b32.xlu0 %v63, 8
    %v247 = vpop.permute.xlu0 %246
    %248 = vrot.lane.b32.xlu0 %v64, 8
    %v249 = vpop.permute.xlu0 %248
    %v252 = vmul.f32 %v171, %v247
    %v253 = vmul.f32 %v174, %v249
    %v254 = vmul.f32 %v244, %v65
    %v255 = vmul.f32 %v245, %v66
    %258 = vrot.lane.b32.xlu0 %v254, 8
    %v259 = vpop.permute.xlu0 %258
    %260 = vrot.lane.b32.xlu0 %v255, 8
    %v261 = vpop.permute.xlu0 %260
    %v264 = vadd.f32 %v252, %v259
    %v265 = vadd.f32 %v253, %v261
    %268 = vrot.lane.b32.xlu0 %v264, 120
    %v269 = vpop.permute.xlu0 %268
    %270 = vrot.lane.b32.xlu0 %v265, 120
    %v271 = vpop.permute.xlu0 %270
    %v274 = vpack.c.bf16 %v237, %v236
    %v275 = vpack.c.bf16 %v271, %v269
    %277 = vrot.lane.b32.xlu0 %v216, 96
    %v278 = vpop.permute.xlu0 %277
    %vm279 = vcmask 64512
    %v281 = vsel %vm279, %v274, 0
    %v284 = vsel %vm279, %v275, 0
    %v287 = vsel %vm279, %v278, 0
    %289 = vmatprep.subr.bf16.mxu0 0
    %290 = vmatpush1.bf16.xpose.msra.mxu0 %v287
    %291 = vmatprep.subr.bf16.mxu0 0
    %292 = vmatpush1.bf16.xpose.msra.mxu0 0
    %293 = vmatprep.subr.bf16.mxu0 0
    %294 = vmatpush1.bf16.xpose.msra.mxu0 0
    %295 = vmatprep.subr.bf16.mxu0 0
    %296 = vmatpush1.bf16.xpose.msra.mxu0 0
    %297 = vmatprep.subr.bf16.mxu0 0
    %298 = vmatpush1.bf16.xpose.msra.mxu0 0
    %299 = vmatprep.subr.bf16.mxu0 0
    %300 = vmatpush1.bf16.xpose.msra.mxu0 0
    %301 = vmatprep.subr.bf16.mxu0 0
    %302 = vmatpush1.bf16.xpose.msra.mxu0 0
    %303 = vmatprep.subr.bf16.mxu0 0
    %304 = vmatpush1.bf16.xpose.msra.mxu0 0
    %305 = vmatprep.subr.bf16.mxu0 0
    %306 = vmatpush1.bf16.xpose.msra.mxu0 0
    %307 = vmatprep.subr.bf16.mxu0 0
    %308 = vmatpush1.bf16.xpose.msra.mxu0 0
    %309 = vmatprep.subr.bf16.mxu0 0
    %310 = vmatpush1.bf16.xpose.msra.mxu0 0
    %311 = vmatprep.subr.bf16.mxu0 0
    %312 = vmatpush1.bf16.xpose.msra.mxu0 0
    %313 = vmatprep.subr.bf16.mxu0 0
    %314 = vmatpush1.bf16.xpose.msra.mxu0 0
    %315 = vmatprep.subr.bf16.mxu0 0
    %316 = vmatpush1.bf16.xpose.msra.mxu0 0
    %317 = vmatprep.subr.bf16.mxu0 0
    %318 = vmatpush1.bf16.xpose.msra.mxu0 0
    %319 = vmatprep.subr.bf16.mxu0 0
    %320 = vmatpush1.bf16.xpose.msra.mxu0 0
    %321 = vmatprep.mubr.bf16.mxu0 0
    %322 = vmatmul.mubr.bf16.gmra.mrb[0].mxu0 %v281
    %v323 = vpop.f32.mrb[0].mxu0
    %v324 = vadd.f32 %v67, %v323
    %v325 = vpop.f32.mrb[0].mxu0
    %v326 = vpop.f32.mrb[0].mxu0
    %v327 = vadd.f32 %v68, %v326
    %v328 = vpop.f32.mrb[0].mxu0
    %329 = vmatprep.mubr.bf16.mxu0 0
    %330 = vmatmul.mubr.bf16.gmra.mrb[0].mxu0 %v284
    %v331 = vpop.f32.mrb[0].mxu0
    %v332 = vadd.f32 %v69, %v331
    %v333 = vpop.f32.mrb[0].mxu0
    %v334 = vpop.f32.mrb[0].mxu0
    %v335 = vadd.f32 %v70, %v334
    %v336 = vpop.f32.mrb[0].mxu0
    %337 = vdwg.mxu0
    %vm338 = vcmask 130048
    %v339 = vsel %vm338, %v324, -inf
    %340 = vmax.xlane.f32.xlu0 %v339
    %v341 = vpop.xlane.xlu0 %340
    %v342 = vsel %vm338, %v327, -inf
    %343 = vmax.xlane.f32.xlu0 %v342
    %v344 = vpop.xlane.xlu0 %343
    %v345 = vsel %vm338, %v332, -inf
    %346 = vmax.xlane.f32.xlu0 %v345
    %v347 = vpop.xlane.xlu0 %346
    %v348 = vsel %vm338, %v335, -inf
    %349 = vmax.xlane.f32.xlu0 %v348
    %v350 = vpop.xlane.xlu0 %349
    %v351 = vsub.f32 %v324, %v341
    %v352 = vsub.f32 %v327, %v344
    %v353 = vsub.f32 %v332, %v347
    %v354 = vsub.f32 %v335, %v350
    %v355 = vmul.f32 %v351, 1.442695
    %v356 = vpow.pop %v355
    %v357 = vmul.f32 %v352, 1.442695
    %v358 = vpow.pop %v357
    %v359 = vmul.f32 %v353, 1.442695
    %v360 = vpow.pop %v359
    %v361 = vmul.f32 %v354, 1.442695
    %v362 = vpow.pop %v361
    %v363 = vsel %vm338, %v356, 0.0
    %364 = vadd.xlane.f32.xlu0 %v363
    %v365 = vpop.xlane.xlu0 %364
    %v366 = vsel %vm338, %v358, 0.0
    %367 = vadd.xlane.f32.xlu0 %v366
    %v368 = vpop.xlane.xlu0 %367
    %v369 = vsel %vm338, %v360, 0.0
    %370 = vadd.xlane.f32.xlu0 %v369
    %v371 = vpop.xlane.xlu0 %370
    %v372 = vsel %vm338, %v362, 0.0
    %373 = vadd.xlane.f32.xlu0 %v372
    %v374 = vpop.xlane.xlu0 %373
    %v375 = vrcp.pop %v365
    %v376 = vrcp.pop %v368
    %v377 = vrcp.pop %v371
    %v378 = vrcp.pop %v374
    %v379 = vmul.f32 %v356, %v375
    %v380 = vmul.f32 %v358, %v376
    %v381 = vmul.f32 %v360, %v377
    %v382 = vmul.f32 %v362, %v378
    %v383 = vpack.c.bf16 %v380, %v379
    %v384 = vpack.c.bf16 %v382, %v381
    %386 = vrot.lane.b32.xlu0 %v217, 80
    %v387 = vpop.permute.xlu0 %386
    %v390 = vsel %vm338, %v383, 0
    %v393 = vsel %vm338, %v384, 0
    %395 = vmatprep.subr.bf16.mxu0 0
    %396 = vmatpush1.bf16.msra.mxu0 %v387
    %397 = vmatprep.subr.bf16.mxu0 0
    %398 = vmatpush1.bf16.msra.mxu0 0
    %399 = vmatprep.subr.bf16.mxu0 0
    %400 = vmatpush1.bf16.msra.mxu0 0
    %401 = vmatprep.subr.bf16.mxu0 0
    %402 = vmatpush1.bf16.msra.mxu0 0
    %403 = vmatprep.subr.bf16.mxu0 0
    %404 = vmatpush1.bf16.msra.mxu0 0
    %405 = vmatprep.subr.bf16.mxu0 0
    %406 = vmatpush1.bf16.msra.mxu0 0
    %407 = vmatprep.subr.bf16.mxu0 0
    %408 = vmatpush1.bf16.msra.mxu0 0
    %409 = vmatprep.subr.bf16.mxu0 0
    %410 = vmatpush1.bf16.msra.mxu0 0
    %411 = vmatprep.subr.bf16.mxu0 0
    %412 = vmatpush1.bf16.msra.mxu0 0
    %413 = vmatprep.subr.bf16.mxu0 0
    %414 = vmatpush1.bf16.msra.mxu0 0
    %415 = vmatprep.subr.bf16.mxu0 0
    %416 = vmatpush1.bf16.msra.mxu0 0
    %417 = vmatprep.subr.bf16.mxu0 0
    %418 = vmatpush1.bf16.msra.mxu0 0
    %419 = vmatprep.subr.bf16.mxu0 0
    %420 = vmatpush1.bf16.msra.mxu0 0
    %421 = vmatprep.subr.bf16.mxu0 0
    %422 = vmatpush1.bf16.msra.mxu0 0
    %423 = vmatprep.subr.bf16.mxu0 0
    %424 = vmatpush1.bf16.msra.mxu0 0
    %425 = vmatprep.subr.bf16.mxu0 0
    %426 = vmatpush1.bf16.msra.mxu0 0
    %427 = vmatprep.mubr.bf16.mxu0 0
    %428 = vmatmul.mubr.bf16.gmra.mrb[0].mxu0 %v390
    %v429 = vpop.f32.mrb[0].mxu0
    %v430 = vadd.f32 0.0, %v429
    %v431 = vpop.f32.mrb[0].mxu0
    %v432 = vpop.f32.mrb[0].mxu0
    %v433 = vadd.f32 0.0, %v432
    %v434 = vpop.f32.mrb[0].mxu0
    %435 = vmatprep.mubr.bf16.mxu0 0
    %436 = vmatmul.mubr.bf16.gmra.mrb[0].mxu0 %v393
    %v437 = vpop.f32.mrb[0].mxu0
    %v438 = vadd.f32 0.0, %v437
    %v439 = vpop.f32.mrb[0].mxu0
    %v440 = vpop.f32.mrb[0].mxu0
    %v441 = vadd.f32 0.0, %v440
    %v442 = vpop.f32.mrb[0].mxu0
    %443 = vdwg.mxu0
    %444 = vrot.lane.b32.xlu0 %v171, 84
    %v445 = vpop.permute.xlu0 %444
    %446 = vrot.lane.b32.xlu0 %v174, 84
    %v447 = vpop.permute.xlu0 %446
    %v450 = vsel %vm191, %v445, %v180
    %v451 = vsel %vm191, %v447, %v182
    %452 = vrot.lane.b32.xlu0 %v63, 40
    %v453 = vpop.permute.xlu0 %452
    %454 = vrot.lane.b32.xlu0 %v64, 40
    %v455 = vpop.permute.xlu0 %454
    %v458 = vmul.f32 %v171, %v453
    %v459 = vmul.f32 %v174, %v455
    %v460 = vmul.f32 %v450, %v65
    %v461 = vmul.f32 %v451, %v66
    %464 = vrot.lane.b32.xlu0 %v460, 40
    %v465 = vpop.permute.xlu0 %464
    %466 = vrot.lane.b32.xlu0 %v461, 40
    %v467 = vpop.permute.xlu0 %466
    %v470 = vadd.f32 %v458, %v465
    %v471 = vadd.f32 %v459, %v467
    %v472 = vpack.c.bf16 %v471, %v470
    %473 = vrot.lane.b32.xlu0 %v171, 108
    %v474 = vpop.permute.xlu0 %473
    %475 = vrot.lane.b32.xlu0 %v174, 108
    %v476 = vpop.permute.xlu0 %475
    %v479 = vsel %vm191, %v474, %v239
    %v480 = vsel %vm191, %v476, %v241
    %481 = vrot.lane.b32.xlu0 %v63, 16
    %v482 = vpop.permute.xlu0 %481
    %483 = vrot.lane.b32.xlu0 %v64, 16
    %v484 = vpop.permute.xlu0 %483
    %v487 = vmul.f32 %v171, %v482
    %v488 = vmul.f32 %v174, %v484
    %v489 = vmul.f32 %v479, %v65
    %v490 = vmul.f32 %v480, %v66
    %493 = vrot.lane.b32.xlu0 %v489, 16
    %v494 = vpop.permute.xlu0 %493
    %495 = vrot.lane.b32.xlu0 %v490, 16
    %v496 = vpop.permute.xlu0 %495
    %v499 = vadd.f32 %v487, %v494
    %v500 = vadd.f32 %v488, %v496
    %v501 = vsel %vm191, %v186, %v474
    %v502 = vsel %vm191, %v188, %v476
    %503 = vrot.lane.b32.xlu0 %v63, 24
    %v504 = vpop.permute.xlu0 %503
    %505 = vrot.lane.b32.xlu0 %v64, 24
    %v506 = vpop.permute.xlu0 %505
    %v509 = vmul.f32 %v171, %v504
    %v510 = vmul.f32 %v174, %v506
    %v511 = vmul.f32 %v501, %v65
    %v512 = vmul.f32 %v502, %v66
    %515 = vrot.lane.b32.xlu0 %v511, 24
    %v516 = vpop.permute.xlu0 %515
    %517 = vrot.lane.b32.xlu0 %v512, 24
    %v518 = vpop.permute.xlu0 %517
    %v521 = vadd.f32 %v509, %v516
    %v522 = vadd.f32 %v510, %v518
    %525 = vrot.lane.b32.xlu0 %v521, 120
    %v526 = vpop.permute.xlu0 %525
    %527 = vrot.lane.b32.xlu0 %v522, 120
    %v528 = vpop.permute.xlu0 %527
    %v531 = vpack.c.bf16 %v500, %v499
    %v532 = vpack.c.bf16 %v528, %v526
    %535 = vrot.lane.b32.xlu0 %v531, 112
    %v536 = vpop.permute.xlu0 %535
    %537 = vrot.lane.b32.xlu0 %v532, 112
    %v538 = vpop.permute.xlu0 %537
    %540 = vrot.lane.b32.xlu0 %v472, 88
    %v541 = vpop.permute.xlu0 %540
    %v543 = vsel %vm279, %v536, 0
    %v546 = vsel %vm279, %v538, 0
    %v549 = vsel %vm279, %v541, 0
    %551 = vmatprep.subr.bf16.mxu0 0
    %552 = vmatpush1.bf16.xpose.msra.mxu0 %v549
    %553 = vmatprep.subr.bf16.mxu0 0
    %554 = vmatpush1.bf16.xpose.msra.mxu0 0
    %555 = vmatprep.subr.bf16.mxu0 0
    %556 = vmatpush1.bf16.xpose.msra.mxu0 0
    %557 = vmatprep.subr.bf16.mxu0 0
    %558 = vmatpush1.bf16.xpose.msra.mxu0 0
    %559 = vmatprep.subr.bf16.mxu0 0
    %560 = vmatpush1.bf16.xpose.msra.mxu0 0
    %561 = vmatprep.subr.bf16.mxu0 0
    %562 = vmatpush1.bf16.xpose.msra.mxu0 0
    %563 = vmatprep.subr.bf16.mxu0 0
    %564 = vmatpush1.bf16.xpose.msra.mxu0 0
    %565 = vmatprep.subr.bf16.mxu0 0
    %566 = vmatpush1.bf16.xpose.msra.mxu0 0
    %567 = vmatprep.subr.bf16.mxu0 0
    %568 = vmatpush1.bf16.xpose.msra.mxu0 0
    %569 = vmatprep.subr.bf16.mxu0 0
    %570 = vmatpush1.bf16.xpose.msra.mxu0 0
    %571 = vmatprep.subr.bf16.mxu0 0
    %572 = vmatpush1.bf16.xpose.msra.mxu0 0
    %573 = vmatprep.subr.bf16.mxu0 0
    %574 = vmatpush1.bf16.xpose.msra.mxu0 0
    %575 = vmatprep.subr.bf16.mxu0 0
    %576 = vmatpush1.bf16.xpose.msra.mxu0 0
    %577 = vmatprep.subr.bf16.mxu0 0
    %578 = vmatpush1.bf16.xpose.msra.mxu0 0
    %579 = vmatprep.subr.bf16.mxu0 0
    %580 = vmatpush1.bf16.xpose.msra.mxu0 0
    %581 = vmatprep.subr.bf16.mxu0 0
    %582 = vmatpush1.bf16.xpose.msra.mxu0 0
    %583 = vmatprep.mubr.bf16.mxu0 0
    %584 = vmatmul.mubr.bf16.gmra.mrb[0].mxu0 %v543
    %v585 = vpop.f32.mrb[0].mxu0
    %v586 = vadd.f32 %v67, %v585
    %v587 = vpop.f32.mrb[0].mxu0
    %v588 = vpop.f32.mrb[0].mxu0
    %v589 = vadd.f32 %v68, %v588
    %v590 = vpop.f32.mrb[0].mxu0
    %591 = vmatprep.mubr.bf16.mxu0 0
    %592 = vmatmul.mubr.bf16.gmra.mrb[0].mxu0 %v546
    %v593 = vpop.f32.mrb[0].mxu0
    %v594 = vadd.f32 %v69, %v593
    %v595 = vpop.f32.mrb[0].mxu0
    %v596 = vpop.f32.mrb[0].mxu0
    %v597 = vadd.f32 %v70, %v596
    %v598 = vpop.f32.mrb[0].mxu0
    %599 = vdwg.mxu0
    %v600 = vsel %vm338, %v586, -inf
    %601 = vmax.xlane.f32.xlu0 %v600
    %v602 = vpop.xlane.xlu0 %601
    %v603 = vsel %vm338, %v589, -inf
    %604 = vmax.xlane.f32.xlu0 %v603
    %v605 = vpop.xlane.xlu0 %604
    %v606 = vsel %vm338, %v594, -inf
    %607 = vmax.xlane.f32.xlu0 %v606
    %v608 = vpop.xlane.xlu0 %607
    %v609 = vsel %vm338, %v597, -inf
    %610 = vmax.xlane.f32.xlu0 %v609
    %v611 = vpop.xlane.xlu0 %610
    %v612 = vsub.f32 %v586, %v602
    %v613 = vsub.f32 %v589, %v605
    %v614 = vsub.f32 %v594, %v608
    %v615 = vsub.f32 %v597, %v611
    %v616 = vmul.f32 %v612, 1.442695
    %v617 = vpow.pop %v616
    %v618 = vmul.f32 %v613, 1.442695
    %v619 = vpow.pop %v618
    %v620 = vmul.f32 %v614, 1.442695
    %v621 = vpow.pop %v620
    %v622 = vmul.f32 %v615, 1.442695
    %v623 = vpow.pop %v622
    %v624 = vsel %vm338, %v617, 0.0
    %625 = vadd.xlane.f32.xlu0 %v624
    %v626 = vpop.xlane.xlu0 %625
    %v627 = vsel %vm338, %v619, 0.0
    %628 = vadd.xlane.f32.xlu0 %v627
    %v629 = vpop.xlane.xlu0 %628
    %v630 = vsel %vm338, %v621, 0.0
    %631 = vadd.xlane.f32.xlu0 %v630
    %v632 = vpop.xlane.xlu0 %631
    %v633 = vsel %vm338, %v623, 0.0
    %634 = vadd.xlane.f32.xlu0 %v633
    %v635 = vpop.xlane.xlu0 %634
    %v636 = vrcp.pop %v626
    %v637 = vrcp.pop %v629
    %v638 = vrcp.pop %v632
    %v639 = vrcp.pop %v635
    %v640 = vmul.f32 %v617, %v636
    %v641 = vmul.f32 %v619, %v637
    %v642 = vmul.f32 %v621, %v638
    %v643 = vmul.f32 %v623, %v639
    %v644 = vpack.c.bf16 %v641, %v640
    %v645 = vpack.c.bf16 %v643, %v642
    %646 = vrot.lane.b32.xlu0 %v217, 72
    %v647 = vpop.permute.xlu0 %646
    %v650 = vsel %vm338, %v644, 0
    %v653 = vsel %vm338, %v645, 0
    %655 = vmatprep.subr.bf16.mxu0 0
    %656 = vmatpush1.bf16.msra.mxu0 %v647
    %657 = vmatprep.subr.bf16.mxu0 0
    %658 = vmatpush1.bf16.msra.mxu0 0
    %659 = vmatprep.subr.bf16.mxu0 0
    %660 = vmatpush1.bf16.msra.mxu0 0
    %661 = vmatprep.subr.bf16.mxu0 0
    %662 = vmatpush1.bf16.msra.mxu0 0
    %663 = vmatprep.subr.bf16.mxu0 0
    %664 = vmatpush1.bf16.msra.mxu0 0
    %665 = vmatprep.subr.bf16.mxu0 0
    %666 = vmatpush1.bf16.msra.mxu0 0
    %667 = vmatprep.subr.bf16.mxu0 0
    %668 = vmatpush1.bf16.msra.mxu0 0
    %669 = vmatprep.subr.bf16.mxu0 0
    %670 = vmatpush1.bf16.msra.mxu0 0
    %671 = vmatprep.subr.bf16.mxu0 0
    %672 = vmatpush1.bf16.msra.mxu0 0
    %673 = vmatprep.subr.bf16.mxu0 0
    %674 = vmatpush1.bf16.msra.mxu0 0
    %675 = vmatprep.subr.bf16.mxu0 0
    %676 = vmatpush1.bf16.msra.mxu0 0
    %677 = vmatprep.subr.bf16.mxu0 0
    %678 = vmatpush1.bf16.msra.mxu0 0
    %679 = vmatprep.subr.bf16.mxu0 0
    %680 = vmatpush1.bf16.msra.mxu0 0
    %681 = vmatprep.subr.bf16.mxu0 0
    %682 = vmatpush1.bf16.msra.mxu0 0
    %683 = vmatprep.subr.bf16.mxu0 0
    %684 = vmatpush1.bf16.msra.mxu0 0
    %685 = vmatprep.subr.bf16.mxu0 0
    %686 = vmatpush1.bf16.msra.mxu0 0
    %687 = vmatprep.mubr.bf16.mxu0 0
    %688 = vmatmul.mubr.bf16.gmra.mrb[0].mxu0 %v650
    %v689 = vpop.f32.mrb[0].mxu0
    %v690 = vadd.f32 0.0, %v689
    %v691 = vpop.f32.mrb[0].mxu0
    %v692 = vpop.f32.mrb[0].mxu0
    %v693 = vadd.f32 0.0, %v692
    %v694 = vpop.f32.mrb[0].mxu0
    %695 = vmatprep.mubr.bf16.mxu0 0
    %696 = vmatmul.mubr.bf16.gmra.mrb[0].mxu0 %v653
    %v697 = vpop.f32.mrb[0].mxu0
    %v698 = vadd.f32 0.0, %v697
    %v699 = vpop.f32.mrb[0].mxu0
    %v700 = vpop.f32.mrb[0].mxu0
    %v701 = vadd.f32 0.0, %v700
    %v702 = vpop.f32.mrb[0].mxu0
    %703 = vdwg.mxu0
    %706 = vrot.lane.b32.xlu0 %v438, 8
    %v707 = vpop.permute.xlu0 %706
    %708 = vrot.lane.b32.xlu0 %v441, 8
    %v709 = vpop.permute.xlu0 %708
    %714 = vrot.lane.b32.xlu0 %v690, 16
    %v715 = vpop.permute.xlu0 %714
    %716 = vrot.lane.b32.xlu0 %v693, 16
    %v717 = vpop.permute.xlu0 %716
    %722 = vrot.lane.b32.xlu0 %v698, 24
    %v723 = vpop.permute.xlu0 %722
    %724 = vrot.lane.b32.xlu0 %v701, 24
    %v725 = vpop.permute.xlu0 %724
    %v728 = vsel %vm279, %v430, %v707
    %v729 = vsel %vm279, %v433, %v709
    %v730 = vsel %vm338, %v728, %v715
    %v731 = vsel %vm338, %v729, %v717
    %vm732 = vcmask 195584
    %v733 = vsel %vm732, %v730, %v723
    %v734 = vsel %vm732, %v731, %v725
    %v735 = vpack.c.bf16 %v734, %v733
    %v736 = vld [vmem:[%s5] sm:$0xf]
    %v737 = vld [vmem:[%s5 + $0x4] sm:$0xf]
    %v738 = vld [vmem:[%s5 + $0x8] sm:$0xf]
    %v739 = vld [vmem:[%s5 + $0xc] sm:$0xf]
    %v740 = vld [vmem:[%s6] sm:$0x1]
    %v742 = vlaneseq
    %v743 = vshrl.u32 %v742, 7
    %v744 = vsub.s32 0, %v743
    %v745 = vrot.slane %v740, %v744
    %v751 = vunpack.c.l.b16 %v736
    %v752 = vunpack.c.l.b16 %v737
    %v753 = vunpack.c.l.b16 %v738
    %v754 = vunpack.c.l.b16 %v739
    %v755 = vpack.c.b16 %v752, %v751
    %v756 = vpack.c.b16 %v754, %v753
    %v760 = vsel %vm74, %v735, 0
    %762 = vmatprep.subr.bf16.mxu0 0
    %763 = vmatpush1.bf16.msra.mxu0 %v755
    %764 = vmatprep.subr.bf16.mxu0 0
    %765 = vmatpush1.bf16.msra.mxu0 %v756
    %766 = vmatprep.subr.bf16.mxu0 0
    %767 = vmatpush1.bf16.msra.mxu0 0
    %768 = vmatprep.subr.bf16.mxu0 0
    %769 = vmatpush1.bf16.msra.mxu0 0
    %770 = vmatprep.subr.bf16.mxu0 0
    %771 = vmatpush1.bf16.msra.mxu0 0
    %772 = vmatprep.subr.bf16.mxu0 0
    %773 = vmatpush1.bf16.msra.mxu0 0
    %774 = vmatprep.subr.bf16.mxu0 0
    %775 = vmatpush1.bf16.msra.mxu0 0
    %776 = vmatprep.subr.bf16.mxu0 0
    %777 = vmatpush1.bf16.msra.mxu0 0
    %778 = vmatprep.subr.bf16.mxu0 0
    %779 = vmatpush1.bf16.msra.mxu0 0
    %780 = vmatprep.subr.bf16.mxu0 0
    %781 = vmatpush1.bf16.msra.mxu0 0
    %782 = vmatprep.subr.bf16.mxu0 0
    %783 = vmatpush1.bf16.msra.mxu0 0
    %784 = vmatprep.subr.bf16.mxu0 0
    %785 = vmatpush1.bf16.msra.mxu0 0
    %786 = vmatprep.subr.bf16.mxu0 0
    %787 = vmatpush1.bf16.msra.mxu0 0
    %788 = vmatprep.subr.bf16.mxu0 0
    %789 = vmatpush1.bf16.msra.mxu0 0
    %790 = vmatprep.subr.bf16.mxu0 0
    %791 = vmatpush1.bf16.msra.mxu0 0
    %792 = vmatprep.subr.bf16.mxu0 0
    %793 = vmatpush1.bf16.msra.mxu0 0
    %794 = vmatprep.mubr.bf16.mxu0 0
    %795 = vmatmul.mubr.bf16.gmra.mrb[0].mxu0 %v760
    %v796 = vpop.f32.mrb[0].mxu0
    %v797 = vadd.f32 %v745, %v796
    %v798 = vpop.f32.mrb[0].mxu0
    %v799 = vpop.f32.mrb[0].mxu0
    %v800 = vadd.f32 %v745, %v799
    %v801 = vpop.f32.mrb[0].mxu0
    %802 = vdwg.mxu0
    %v803 = vadd.f32 %v61, %v797
    %v804 = vadd.f32 %v62, %v800
    %v805 = vld [vmem:[%s2] sm:$0x1]
    %v806 = vmul.f32 %v803, %v803
    %v807 = vmul.f32 %v804, %v804
    %v808 = vsel %vm74, %v806, 0.0
    %809 = vadd.xlane.f32.xlu0 %v808
    %v810 = vpop.xlane.xlu0 %809
    %v811 = vsel %vm74, %v807, 0.0
    %812 = vadd.xlane.f32.xlu0 %v811
    %v813 = vpop.xlane.xlu0 %812
    %v814 = vrsqrt.pop %v810
    %v815 = vmul.f32 %v810, %v814
    %vm816 = vcmp.eq.f32.partialorder %v810, inf
    %v817 = vsel %vm816, %v810, %v815
    %vm818 = vcmp.eq.f32.partialorder %v810, 0.0
    %v819 = vand.u32 %v810, 2147483648
    %v820 = vsel %vm818, %v819, %v817
    %v821 = vrsqrt.pop %v813
    %v822 = vmul.f32 %v813, %v821
    %vm823 = vcmp.eq.f32.partialorder %v813, inf
    %v824 = vsel %vm823, %v813, %v822
    %vm825 = vcmp.eq.f32.partialorder %v813, 0.0
    %v826 = vand.u32 %v813, 2147483648
    %v827 = vsel %vm825, %v826, %v824
    %v828 = vadd.f32 %v820, 1e-08
    %v829 = vadd.f32 %v827, 1e-08
    %v830 = vrcp.pop %v828
    %v831 = vrcp.pop %v829
    %v832 = vmul.f32 %v803, %v830
    %v833 = vmul.f32 %v804, %v831
    %v835 = vlaneseq
    %v836 = vshrl.u32 %v835, 7
    %v837 = vsub.s32 0, %v836
    %v838 = vrot.slane %v805, %v837
    %v840 = vmul.f32 %v832, %v838
    %v841 = vmul.f32 %v833, %v838
    %v842 = vpack.c.bf16 %v841, %v840
    %v843 = vld [vmem:[%s7] sm:$0xf]
    %v844 = vld [vmem:[%s7 + $0x4] sm:$0xf]
    %v845 = vld [vmem:[%s7 + $0x8] sm:$0xf]
    %v846 = vld [vmem:[%s7 + $0xc] sm:$0xf]
    %v847 = vld [vmem:[%s8] sm:$0x1]
    %v849 = vlaneseq
    %v850 = vshrl.u32 %v849, 7
    %v851 = vsub.s32 0, %v850
    %v852 = vrot.slane %v847, %v851
    %v858 = vunpack.c.l.b16 %v843
    %v859 = vunpack.c.l.b16 %v844
    %v860 = vunpack.c.l.b16 %v845
    %v861 = vunpack.c.l.b16 %v846
    %v862 = vpack.c.b16 %v859, %v858
    %v863 = vpack.c.b16 %v861, %v860
    %v867 = vsel %vm74, %v842, 0
    %869 = vmatprep.subr.bf16.mxu0 0
    %870 = vmatpush1.bf16.msra.mxu0 %v862
    %871 = vmatprep.subr.bf16.mxu0 0
    %872 = vmatpush1.bf16.msra.mxu0 %v863
    %873 = vmatprep.subr.bf16.mxu0 0
    %874 = vmatpush1.bf16.msra.mxu0 0
    %875 = vmatprep.subr.bf16.mxu0 0
    %876 = vmatpush1.bf16.msra.mxu0 0
    %877 = vmatprep.subr.bf16.mxu0 0
    %878 = vmatpush1.bf16.msra.mxu0 0
    %879 = vmatprep.subr.bf16.mxu0 0
    %880 = vmatpush1.bf16.msra.mxu0 0
    %881 = vmatprep.subr.bf16.mxu0 0
    %882 = vmatpush1.bf16.msra.mxu0 0
    %883 = vmatprep.subr.bf16.mxu0 0
    %884 = vmatpush1.bf16.msra.mxu0 0
    %885 = vmatprep.subr.bf16.mxu0 0
    %886 = vmatpush1.bf16.msra.mxu0 0
    %887 = vmatprep.subr.bf16.mxu0 0
    %888 = vmatpush1.bf16.msra.mxu0 0
    %889 = vmatprep.subr.bf16.mxu0 0
    %890 = vmatpush1.bf16.msra.mxu0 0
    %891 = vmatprep.subr.bf16.mxu0 0
    %892 = vmatpush1.bf16.msra.mxu0 0
    %893 = vmatprep.subr.bf16.mxu0 0
    %894 = vmatpush1.bf16.msra.mxu0 0
    %895 = vmatprep.subr.bf16.mxu0 0
    %896 = vmatpush1.bf16.msra.mxu0 0
    %897 = vmatprep.subr.bf16.mxu0 0
    %898 = vmatpush1.bf16.msra.mxu0 0
    %899 = vmatprep.subr.bf16.mxu0 0
    %900 = vmatpush1.bf16.msra.mxu0 0
    %901 = vmatprep.mubr.bf16.mxu0 0
    %902 = vmatmul.mubr.bf16.gmra.mrb[0].mxu0 %v867
    %v903 = vpop.f32.mrb[0].mxu0
    %v904 = vadd.f32 %v852, %v903
    %v905 = vpop.f32.mrb[0].mxu0
    %v906 = vpop.f32.mrb[0].mxu0
    %v907 = vadd.f32 %v852, %v906
    %v908 = vpop.f32.mrb[0].mxu0
    %909 = vdwg.mxu0
    %v910 = vxor.u32 %v904, 2147483648
    %v911 = vxor.u32 %v907, 2147483648
    %v912 = vmul.f32 %v910, 1.442695
    %v913 = vpow.pop %v912
    %v914 = vmul.f32 %v911, 1.442695
    %v915 = vpow.pop %v914
    %v916 = vadd.f32 %v913, 1.0
    %v917 = vadd.f32 %v915, 1.0
    %v918 = vrcp.pop %v916
    %v919 = vmul.f32 1.0, %v918
    %v920 = vrcp.pop %v917
    %v921 = vmul.f32 1.0, %v920
    %v922 = vmul.f32 %v904, %v919
    %v923 = vmul.f32 %v907, %v921
    %926 = vrot.lane.b32.xlu0 %v922, 96
    %v927 = vpop.permute.xlu0 %926
    %928 = vrot.lane.b32.xlu0 %v923, 96
    %v929 = vpop.permute.xlu0 %928
    %v932 = vmul.f32 %v904, %v927
    %v933 = vmul.f32 %v907, %v929
    %v934 = vpack.c.bf16 %v933, %v932
    %v935 = vld [vmem:[%s9] sm:$0xf]
    %v936 = vld [vmem:[%s9 + $0x4] sm:$0xf]
    %v937 = vld [vmem:[%s9 + $0x8] sm:$0xf]
    %v938 = vld [vmem:[%s9 + $0xc] sm:$0xf]
    %v939 = vld [vmem:[%s10] sm:$0x1]
    %v941 = vlaneseq
    %v942 = vshrl.u32 %v941, 7
    %v943 = vsub.s32 0, %v942
    %v944 = vrot.slane %v939, %v943
    %v950 = vunpack.c.l.b16 %v935
    %v951 = vunpack.c.l.b16 %v936
    %v952 = vunpack.c.l.b16 %v937
    %v953 = vunpack.c.l.b16 %v938
    %v954 = vpack.c.b16 %v951, %v950
    %v955 = vpack.c.b16 %v953, %v952
    %v959 = vsel %vm74, %v934, 0
    %961 = vmatprep.subr.bf16.mxu0 0
    %962 = vmatpush1.bf16.msra.mxu0 %v954
    %963 = vmatprep.subr.bf16.mxu0 0
    %964 = vmatpush1.bf16.msra.mxu0 %v955
    %965 = vmatprep.subr.bf16.mxu0 0
    %966 = vmatpush1.bf16.msra.mxu0 0
    %967 = vmatprep.subr.bf16.mxu0 0
    %968 = vmatpush1.bf16.msra.mxu0 0
    %969 = vmatprep.subr.bf16.mxu0 0
    %970 = vmatpush1.bf16.msra.mxu0 0
    %971 = vmatprep.subr.bf16.mxu0 0
    %972 = vmatpush1.bf16.msra.mxu0 0
    %973 = vmatprep.subr.bf16.mxu0 0
    %974 = vmatpush1.bf16.msra.mxu0 0
    %975 = vmatprep.subr.bf16.mxu0 0
    %976 = vmatpush1.bf16.msra.mxu0 0
    %977 = vmatprep.subr.bf16.mxu0 0
    %978 = vmatpush1.bf16.msra.mxu0 0
    %979 = vmatprep.subr.bf16.mxu0 0
    %980 = vmatpush1.bf16.msra.mxu0 0
    %981 = vmatprep.subr.bf16.mxu0 0
    %982 = vmatpush1.bf16.msra.mxu0 0
    %983 = vmatprep.subr.bf16.mxu0 0
    %984 = vmatpush1.bf16.msra.mxu0 0
    %985 = vmatprep.subr.bf16.mxu0 0
    %986 = vmatpush1.bf16.msra.mxu0 0
    %987 = vmatprep.subr.bf16.mxu0 0
    %988 = vmatpush1.bf16.msra.mxu0 0
    %989 = vmatprep.subr.bf16.mxu0 0
    %990 = vmatpush1.bf16.msra.mxu0 0
    %991 = vmatprep.subr.bf16.mxu0 0
    %992 = vmatpush1.bf16.msra.mxu0 0
    %993 = vmatprep.mubr.bf16.mxu0 0
    %994 = vmatmul.mubr.bf16.gmra.mrb[0].mxu0 %v959
    %v995 = vpop.f32.mrb[0].mxu0
    %v996 = vadd.f32 %v944, %v995
    %v997 = vpop.f32.mrb[0].mxu0
    %v998 = vpop.f32.mrb[0].mxu0
    %v999 = vadd.f32 %v944, %v998
    %v1000 = vpop.f32.mrb[0].mxu0
    %1001 = vdwg.mxu0
    %v1002 = vadd.f32 %v803, %v996
    %v1003 = vadd.f32 %v804, %v999
    %1004 = vst.msk [vmem:[#allocation5] sm:$0xff] %vm74, %v1002
    %1005 = vst.msk [vmem:[#allocation5 + $0x8] sm:$0xff] %vm74, %v1003
    // Predicated region
    $region62: #{tpu_custom_call.1} parent=1 // pred_check
      _
    $region63: #{tpu_custom_call.1} parent=1 // pred_check_branch
      %1007 = sbr.rel (0) target = $region65
    $region64: #{tpu_custom_call.1} parent=1 // pred_region
      %s1009 = ssub.s32 256, 256
      %1010 = vsyncadd [#allocation4], %s1009
      %s1011 = sshll.u32 [#allocation5], 4
      %s1012 = int_to_ptr.vmem [resolvable:$true] %s1011
      %1017 = dma.vmem_to_hbm [thread:$0]  %s1012, 256, %s14, [#allocation4], 128, 128, 8
    $region65: #{tpu_custom_call.1} parent=1 // pred_fallthru
      _
    // Predicated region
    $region66: #{tpu_custom_call.1} parent=1 // pred_check
      _
    $region67: #{tpu_custom_call.1} parent=1 // pred_check_branch
      %1019 = sbr.rel (0) target = $region69
    $region68: #{tpu_custom_call.1} parent=1 // pred_region
      %1020 = dma.done [#allocation4], 256
    $region69: #{tpu_custom_call.1} parent=1 // pred_fallthru
      _
    %1021 = vsyncpa [#allocation3], 1
    %1022 = vsyncpa [#allocation4], 1

</llo_original>
